<compile_context>
chip_gen: v6e
topology: v6e:2x2x1
jax: 0.10.0
libtpu: 0.0.40
codegen_flags: <defaults>
</compile_context>

<pallas_src>
import functools

import jax
import jax.numpy as jnp
from jax.experimental import pallas as pl
from jax.experimental.pallas import tpu as pltpu


def _round_up(x, m):
    return ((x + m - 1) // m) * m


def _charcnn_kernel(x_ref, w_ref, b_ref, o_ref, *, n_pos, c_pad):
    """One M-tile of the fused conv + max-pool.

    x_ref: [TM, W*E]            embedded (and dropped-out) chars, one row/word
    w_ref: [W*E, n_pos*c_pad]   block-Toeplitz conv weight (VMEM resident)
    b_ref: [1, c_pad]           conv bias, channel-padded
    o_ref: [TM, c_pad]          max-pooled channel features
    """
    # Single MXU matmul computes all n_pos conv positions at once (K = W*E).
    # Operands stay in their storage dtype; accumulate in f32.
    y = jnp.dot(x_ref[...], w_ref[...], preferred_element_type=jnp.float32)
    # Max-pool over conv positions: static, 128-lane-aligned column slices.
    acc = y[:, 0:c_pad]
    for t in range(1, n_pos):
        acc = jnp.maximum(acc, y[:, t * c_pad:(t + 1) * c_pad])
    o_ref[...] = (acc + b_ref[...].astype(jnp.float32)).astype(o_ref.dtype)


def _toeplitz_conv_weight(conv_weight, word_len, n_pos, c_pad, dtype):
    """[C, 1, cw, E] conv kernel -> [W*E, n_pos*c_pad] block-Toeplitz matrix."""
    c_out, _, cw, e_dim = conv_weight.shape
    wk = conv_weight.reshape(c_out, cw * e_dim).T            # [cw*E, C]
    wk = jnp.pad(wk, ((0, 0), (0, c_pad - c_out)))           # [cw*E, Cpad]
    big = jnp.zeros((word_len * e_dim, n_pos * c_pad), dtype=dtype)
    for t in range(n_pos):
        big = big.at[t * e_dim:t * e_dim + cw * e_dim,
                     t * c_pad:(t + 1) * c_pad].set(wk.astype(dtype))
    return big


def charcnn_forward(char_ids, emb_table, conv_weight, conv_bias, *,
                    p=0.0, training=False, rng=None, block_m=256):
    """Pallas equivalent of CharCNN.forward.

    char_ids:    [B, S, W] int32 character ids
    emb_table:   [V, E]    char embedding table
    conv_weight: [C, 1, cw, E], conv_bias: [C]
    returns      [B, S, C]
    """
    batch, seq, word_len = char_ids.shape
    _, e_dim = emb_table.shape
    c_out, _, cw, e_dim2 = conv_weight.shape
    assert e_dim2 == e_dim
    n_pos = word_len - cw + 1            # conv output positions per word
    m = batch * seq                      # one row per (batch, token)
    c_pad = _round_up(c_out, 128)        # lane-dense output channels

    # Embedding gather + inverted dropout (torch.nn.Dropout semantics) in the
    # wrapper: gather / RNG have no clean in-kernel equivalent here.
    emb = jnp.take(emb_table, char_ids.reshape(-1), axis=0)   # [M*W, E]
    emb = emb.reshape(m, word_len * e_dim)                    # [M, W*E]
    if training and p > 0.0:
        if rng is None:
            rng = jax.random.PRNGKey(0)
        keep = jax.random.bernoulli(rng, 1.0 - p, emb.shape)
        emb = jnp.where(keep, emb * (1.0 / (1.0 - p)), jnp.zeros_like(emb))

    # M tiling: tile rows are a multiple of 8; grid over row tiles.
    tm = max(8, min(block_m, _round_up(m, 8)))
    tm = _round_up(tm, 8)
    n_tiles = pl.cdiv(m, tm)
    m_pad = n_tiles * tm
    if m_pad != m:
        emb = jnp.pad(emb, ((0, m_pad - m), (0, 0)))

    w_big = _toeplitz_conv_weight(conv_weight, word_len, n_pos, c_pad, emb.dtype)
    b_pad = jnp.pad(conv_bias.astype(jnp.float32),
                    (0, c_pad - c_out)).reshape(1, c_pad)

    kernel = functools.partial(_charcnn_kernel, n_pos=n_pos, c_pad=c_pad)
    out = pl.pallas_call(
        kernel,
        out_shape=jax.ShapeDtypeStruct((m_pad, c_pad), emb.dtype),
        grid=(n_tiles,),
        in_specs=[
            # x tile marches over M
            pl.BlockSpec((tm, word_len * e_dim), lambda i: (i, 0)),
            # weight + bias: constant index_map -> VMEM resident across tiles
            pl.BlockSpec((word_len * e_dim, n_pos * c_pad), lambda i: (0, 0)),
            pl.BlockSpec((1, c_pad), lambda i: (0, 0)),
        ],
        out_specs=pl.BlockSpec((tm, c_pad), lambda i: (i, 0)),
        compiler_params=pltpu.CompilerParams(
            dimension_semantics=("parallel",),        # shard M tiles across TCs
            vmem_limit_bytes=64 * 1024 * 1024),       # safe on v5e/v6e/v7x
    )(emb, w_big, b_pad)

    return out[:m, :c_out].reshape(batch, seq, c_out)


if __name__ == "__main__":
    # Module config (synthetic, deterministic init — no checkpoint load).
    char_emb_dim, char_vocab_size = 8, 50
    channel_num, channel_width, dropout_p = 64, 3, 0.1
    batch, seq, word_len = 2, 8, 16

    key = jax.random.PRNGKey(0)
    k_ids, k_emb, k_w, k_b, k_drop = jax.random.split(key, 5)

    char_ids = jax.random.randint(k_ids, (batch, seq, word_len), 0,
                                  char_vocab_size, dtype=jnp.int32)
    # nn.Embedding default init: N(0, 1).
    emb_table = jax.random.normal(k_emb, (char_vocab_size, char_emb_dim),
                                  dtype=jnp.float32)
    # nn.Conv2d default init: U(-1/sqrt(fan_in), 1/sqrt(fan_in)).
    fan_in = 1 * channel_width * char_emb_dim
    bound = 1.0 / (fan_in ** 0.5)
    conv_weight = jax.random.uniform(
        k_w, (channel_num, 1, channel_width, char_emb_dim),
        minval=-bound, maxval=bound, dtype=jnp.float32)
    conv_bias = jax.random.uniform(
        k_b, (channel_num,), minval=-bound, maxval=bound, dtype=jnp.float32)

    # Eval-mode forward (nn.Dropout is identity when not training).
    # block_m=8 -> 2 grid steps even at these tiny demo shapes.
    out = charcnn_forward(char_ids, emb_table, conv_weight, conv_bias,
                          p=dropout_p, training=False, block_m=8)
    out = jax.block_until_ready(out)

    # Pure-JAX reference: embedding -> Conv2d VALID -> +bias -> max over positions.
    emb_ref = emb_table[char_ids]                                     # [B,S,W,E]
    xr = emb_ref.reshape(batch * seq, 1, word_len, char_emb_dim)      # NCHW
    conv = jax.lax.conv_general_dilated(
        xr, conv_weight, window_strides=(1, 1), padding="VALID",
        dimension_numbers=("NCHW", "OIHW", "NCHW"))[..., 0]           # [M,C,T]
    conv = conv + conv_bias[None, :, None]
    ref = conv.max(axis=-1).reshape(batch, seq, channel_num)

    assert out.shape == (batch, seq, channel_num)
    assert jnp.allclose(out, ref, atol=1e-2, rtol=1e-2), (
        float(jnp.max(jnp.abs(out - ref))))

    # Also exercise the training-mode (dropout) path once.
    out_train = jax.block_until_ready(
        charcnn_forward(char_ids, emb_table, conv_weight, conv_bias,
                        p=dropout_p, training=True, rng=k_drop, block_m=8))
    assert out_train.shape == (batch, seq, channel_num)
    assert bool(jnp.all(jnp.isfinite(out_train)))

    print("KERNEL_OK")
</pallas_src>

<mosaic_0001>
module attributes {stable_mosaic.version = 11 : i64} {
  func.func @_charcnn_kernel(%arg0: i32, %arg1: memref<8x128xf32, #tpu.memory_space<vmem>>, %arg2: memref<128x1792xf32, #tpu.memory_space<vmem>>, %arg3: memref<1x128xf32, #tpu.memory_space<vmem>>, %arg4: memref<8x128xf32, #tpu.memory_space<vmem>>) attributes {dimension_semantics = [#tpu.dimension_semantics<parallel>], iteration_bounds = array<i64: 2>, scalar_prefetch = 0 : i64, scratch_operands = 0 : i64, tpu.core_type = #tpu.core_type<tc>, window_params = [{transform_indices = @transform_0, window_bounds = array<i64: 8, 128>}, {pipeline_mode = #tpu.pipeline_mode<synchronous>, transform_indices = @transform_1, window_bounds = array<i64: 128, 1792>}, {pipeline_mode = #tpu.pipeline_mode<synchronous>, transform_indices = @transform_2, window_bounds = array<i64: 1, 128>}, {transform_indices = @transform_3, window_bounds = array<i64: 8, 128>}]} {
    %c0 = arith.constant 0 : index
    %c0_0 = arith.constant 0 : index
    %0 = vector.load %arg1[%c0, %c0_0] : memref<8x128xf32, #tpu.memory_space<vmem>>, vector<8x128xf32>
    %c0_1 = arith.constant 0 : index
    %c0_2 = arith.constant 0 : index
    %1 = vector.load %arg2[%c0_1, %c0_2] : memref<128x1792xf32, #tpu.memory_space<vmem>>, vector<128x1792xf32>
    %cst = arith.constant dense<0.000000e+00> : vector<8x1792xf32>
    %2 = tpu.matmul %0, %1, %cst {dimension_numbers = #tpu.dot_dimension_numbers<[1], [0], [0], [1], [0, 0, 1, 1], [], []>} : vector<8x128xf32>, vector<128x1792xf32>, vector<8x1792xf32> -> vector<8x1792xf32>
    %3 = vector.extract_strided_slice %2 {offsets = [0, 0], sizes = [8, 128], strides = [1, 1]} : vector<8x1792xf32> to vector<8x128xf32>
    %4 = vector.extract_strided_slice %2 {offsets = [0, 128], sizes = [8, 128], strides = [1, 1]} : vector<8x1792xf32> to vector<8x128xf32>
    %5 = arith.maximumf %3, %4 : vector<8x128xf32>
    %6 = vector.extract_strided_slice %2 {offsets = [0, 256], sizes = [8, 128], strides = [1, 1]} : vector<8x1792xf32> to vector<8x128xf32>
    %7 = arith.maximumf %5, %6 : vector<8x128xf32>
    %8 = vector.extract_strided_slice %2 {offsets = [0, 384], sizes = [8, 128], strides = [1, 1]} : vector<8x1792xf32> to vector<8x128xf32>
    %9 = arith.maximumf %7, %8 : vector<8x128xf32>
    %10 = vector.extract_strided_slice %2 {offsets = [0, 512], sizes = [8, 128], strides = [1, 1]} : vector<8x1792xf32> to vector<8x128xf32>
    %11 = arith.maximumf %9, %10 : vector<8x128xf32>
    %12 = vector.extract_strided_slice %2 {offsets = [0, 640], sizes = [8, 128], strides = [1, 1]} : vector<8x1792xf32> to vector<8x128xf32>
    %13 = arith.maximumf %11, %12 : vector<8x128xf32>
    %14 = vector.extract_strided_slice %2 {offsets = [0, 768], sizes = [8, 128], strides = [1, 1]} : vector<8x1792xf32> to vector<8x128xf32>
    %15 = arith.maximumf %13, %14 : vector<8x128xf32>
    %16 = vector.extract_strided_slice %2 {offsets = [0, 896], sizes = [8, 128], strides = [1, 1]} : vector<8x1792xf32> to vector<8x128xf32>
    %17 = arith.maximumf %15, %16 : vector<8x128xf32>
    %18 = vector.extract_strided_slice %2 {offsets = [0, 1024], sizes = [8, 128], strides = [1, 1]} : vector<8x1792xf32> to vector<8x128xf32>
    %19 = arith.maximumf %17, %18 : vector<8x128xf32>
    %20 = vector.extract_strided_slice %2 {offsets = [0, 1152], sizes = [8, 128], strides = [1, 1]} : vector<8x1792xf32> to vector<8x128xf32>
    %21 = arith.maximumf %19, %20 : vector<8x128xf32>
    %22 = vector.extract_strided_slice %2 {offsets = [0, 1280], sizes = [8, 128], strides = [1, 1]} : vector<8x1792xf32> to vector<8x128xf32>
    %23 = arith.maximumf %21, %22 : vector<8x128xf32>
    %24 = vector.extract_strided_slice %2 {offsets = [0, 1408], sizes = [8, 128], strides = [1, 1]} : vector<8x1792xf32> to vector<8x128xf32>
    %25 = arith.maximumf %23, %24 : vector<8x128xf32>
    %26 = vector.extract_strided_slice %2 {offsets = [0, 1536], sizes = [8, 128], strides = [1, 1]} : vector<8x1792xf32> to vector<8x128xf32>
    %27 = arith.maximumf %25, %26 : vector<8x128xf32>
    %28 = vector.extract_strided_slice %2 {offsets = [0, 1664], sizes = [8, 128], strides = [1, 1]} : vector<8x1792xf32> to vector<8x128xf32>
    %29 = arith.maximumf %27, %28 : vector<8x128xf32>
    %c0_3 = arith.constant 0 : index
    %c0_4 = arith.constant 0 : index
    %30 = vector.load %arg3[%c0_3, %c0_4] : memref<1x128xf32, #tpu.memory_space<vmem>>, vector<1x128xf32>
    %31 = vector.broadcast %30 : vector<1x128xf32> to vector<8x128xf32>
    %32 = arith.addf %29, %31 : vector<8x128xf32>
    %c0_5 = arith.constant 0 : index
    %c0_6 = arith.constant 0 : index
    %33 = vector.load %arg4[%c0_5, %c0_6] : memref<8x128xf32, #tpu.memory_space<vmem>>, vector<8x128xf32>
    tpu.vector_store %arg4[%c0_5, %c0_6], %32 {strides = array<i32>} : memref<8x128xf32, #tpu.memory_space<vmem>>, vector<8x128xf32>,
    return
  }
  func.func @transform_0(%arg0: i32) -> (i32, i32) {
    %c0_i32 = arith.constant 0 : i32
    %c0_i32_0 = arith.constant 0 : i32
    return %arg0, %c0_i32 : i32, i32
  }
  func.func @transform_1(%arg0: i32) -> (i32, i32) {
    %c0_i32 = arith.constant 0 : i32
    %c0_i32_0 = arith.constant 0 : i32
    %c0_i32_1 = arith.constant 0 : i32
    return %c0_i32, %c0_i32_0 : i32, i32
  }
  func.func @transform_2(%arg0: i32) -> (i32, i32) {
    %c0_i32 = arith.constant 0 : i32
    %c0_i32_0 = arith.constant 0 : i32
    %c0_i32_1 = arith.constant 0 : i32
    return %c0_i32, %c0_i32_0 : i32, i32
  }
  func.func @transform_3(%arg0: i32) -> (i32, i32) {
    %c0_i32 = arith.constant 0 : i32
    %c0_i32_0 = arith.constant 0 : i32
    return %arg0, %c0_i32 : i32, i32
  }
}

</mosaic_0001>

<llo_original>
// kernel: tpu_custom_call.1
$region0: #{tpu_custom_call.1}
  #allocation0 [shape = 'u32[]', space=smem, size = 0x4, offset = 0x4, fixed_abs, tag = 'smem constant byte address 0x4 - core index']
  #allocation1 [shape = 'u32[144,128]{1,0:T(1,128)}', space=vmem, size = 0x12000, scoped, tag = 'internal scratch']
  %s0 = inlined_call_operand.hbm [shape: f32[16,128], index: 0, kind: input, shape index: {}]
  %s1 = inlined_call_operand.hbm [shape: f32[128,1792], index: 1, kind: input, shape index: {}]
  %s2 = inlined_call_operand.vmem [shape: f32[1,128], index: 2, kind: input, shape index: {}]
  %s3 = inlined_call_operand.hbm [shape: f32[16,128], index: 3, kind: output, shape index: {}]
  %s4 = sld [smem:[#allocation0]]
  $region53: #{tpu_custom_call.1} parent=0
    _
  %s6 = ssub.s32 1, %s4
  %s7 = scalar_select 0, %s6, %s4
  $region1: #{tpu_custom_call.1} parent=0
    #allocation2 [shape = 'u8[8192]{0}', space=vmem, size = 0x2000, scoped, tag = 'input window, operand 0']
    #allocation3 [shape = 's32[2]{0}', space=sflag, size = 0x8, scoped, tag = 'scoped memory for tpu_custom_call.1']
    #allocation4 [shape = 's32[2]{0}', space=sflag, size = 0x8, scoped, tag = 'scoped memory for tpu_custom_call.1']
    #allocation5 [shape = 'u8[917504]{0}', space=vmem, size = 0xe0000, scoped, tag = 'input window, operand 1, single buffered']
    #allocation6 [shape = 's32[1]{0}', space=sflag, size = 0x4, scoped, tag = 'scoped memory for tpu_custom_call.1']
    #allocation7 [shape = 'u8[8192]{0}', space=vmem, size = 0x2000, scoped, tag = 'output window, operand 0']
    %8 = vsyncpa [#allocation3], 0
    %s9 = scalar_lea.sflag [#allocation3], 1
    %10 = vsyncpa %s9, 0
    %11 = vsyncpa [#allocation6], 0
    %12 = vsyncpa [#allocation4], 0
    %s13 = scalar_lea.sflag [#allocation4], 1
    %14 = vsyncpa %s13, 0
    loop: start=0, step=1, limit=4
    $region2: #{tpu_custom_call.1} parent=1 // loop_pre_header
      _
    $region3: #{tpu_custom_call.1} parent=1 // loop_header
      %s16 = sphi 0, %s20
      %p17 = scmp.ge.s32.totalorder %s16, 4
      %s26 = sphi 0, %s28
      %s29 = sphi 0, %s26
      %s30 = sphi 0, %s29
      %s46 = sphi 0, %s30
      %s50 = sphi 0, %s50
      %s52 = sphi 0, %s50
      %s53 = sphi 0, %s52
      %s67 = sphi 0, %s53
      %s71 = sphi 0, %s71
      %s73 = sphi 0, %s71
      %s74 = sphi 0, %s73
      %s88 = sphi 0, %s74
      %s94 = sphi 0, %s96
      %s97 = sphi 0, %s94
      %s98 = sphi 0, %s97
      %s114 = sphi 0, %s98
    $region4: #{tpu_custom_call.1} parent=1 // loop_header_branch
      %19 = sbr.rel (%p17) target = $region8
    $region5: #{tpu_custom_call.1} parent=1 // loop_body
      %s21 = ssub.s32 %s16, 1
      %s22 = ssub.s32 %s16, 2
      %s23 = sadd.s32 %s16, 1
      %s24 = ssub.s32 %s16, %s23
      %p25 = scmp.eq.s32.totalorder %s24, 0
      %s27 = sadd.s32 %s26, 1
      %s28 = scalar_select %p25, %s26, %s27
      %p31 = pneg %p25
      %p32 = scmp.eq.s32.totalorder %s16, 1
      %p33 = por %p31, %p32
      %p34 = scmp.ne.s32.totalorder %s26, %s29
      %p35 = scmp.eq.s32.totalorder %s16, 0
      %p36 = por %p34, %p35
      %p37 = scmp.ne.s32.totalorder %s26, %s29
      %p38 = scmp.eq.s32.totalorder %s21, 1
      %p39 = por %p37, %p38
      %p40 = scmp.ne.s32.totalorder %s29, %s30
      %p41 = scmp.eq.s32.totalorder %s21, 0
      %p42 = por %p40, %p41
      %p43 = scmp.ne.s32.totalorder %s29, %s30
      %p44 = scmp.eq.s32.totalorder %s22, 1
      %p45 = por %p43, %p44
      %p47 = scmp.ne.s32.totalorder %s30, %s46
      %p48 = scmp.eq.s32.totalorder %s22, 0
      %p49 = por %p47, %p48
      %s51 = sadd.s32 %s50, 1
      %p54 = scmp.eq.s32.totalorder %s16, 1
      %p55 = scmp.ne.s32.totalorder %s50, %s52
      %p56 = scmp.eq.s32.totalorder %s16, 0
      %p57 = por %p55, %p56
      %p58 = scmp.ne.s32.totalorder %s50, %s52
      %p59 = scmp.eq.s32.totalorder %s21, 1
      %p60 = por %p58, %p59
      %p61 = scmp.ne.s32.totalorder %s52, %s53
      %p62 = scmp.eq.s32.totalorder %s21, 0
      %p63 = por %p61, %p62
      %p64 = scmp.ne.s32.totalorder %s52, %s53
      %p65 = scmp.eq.s32.totalorder %s22, 1
      %p66 = por %p64, %p65
      %p68 = scmp.ne.s32.totalorder %s53, %s67
      %p69 = scmp.eq.s32.totalorder %s22, 0
      %p70 = por %p68, %p69
      %s72 = sadd.s32 %s71, 1
      %p75 = scmp.eq.s32.totalorder %s16, 1
      %p76 = scmp.ne.s32.totalorder %s71, %s73
      %p77 = scmp.eq.s32.totalorder %s16, 0
      %p78 = por %p76, %p77
      %p79 = scmp.ne.s32.totalorder %s71, %s73
      %p80 = scmp.eq.s32.totalorder %s21, 1
      %p81 = por %p79, %p80
      %p82 = scmp.ne.s32.totalorder %s73, %s74
      %p83 = scmp.eq.s32.totalorder %s21, 0
      %p84 = por %p82, %p83
      %p85 = scmp.ne.s32.totalorder %s73, %s74
      %p86 = scmp.eq.s32.totalorder %s22, 1
      %p87 = por %p85, %p86
      %p89 = scmp.ne.s32.totalorder %s74, %s88
      %p90 = scmp.eq.s32.totalorder %s22, 0
      %p91 = por %p89, %p90
      %s92 = ssub.s32 %s16, %s23
      %p93 = scmp.eq.s32.totalorder %s92, 0
      %s95 = sadd.s32 %s94, 1
      %s96 = scalar_select %p93, %s94, %s95
      %p99 = pneg %p93
      %p100 = scmp.eq.s32.totalorder %s16, 1
      %p101 = por %p99, %p100
      %p102 = scmp.ne.s32.totalorder %s94, %s97
      %p103 = scmp.eq.s32.totalorder %s16, 0
      %p104 = por %p102, %p103
      %p105 = scmp.ne.s32.totalorder %s94, %s97
      %p106 = scmp.eq.s32.totalorder %s21, 1
      %p107 = por %p105, %p106
      %p108 = scmp.ne.s32.totalorder %s97, %s98
      %p109 = scmp.eq.s32.totalorder %s21, 0
      %p110 = por %p108, %p109
      %p111 = scmp.ne.s32.totalorder %s97, %s98
      %p112 = scmp.eq.s32.totalorder %s22, 1
      %p113 = por %p111, %p112
      %p115 = scmp.ne.s32.totalorder %s98, %s114
      %p116 = scmp.eq.s32.totalorder %s22, 0
      %p117 = por %p115, %p116
      %p118 = scmp.le.s32.totalorder 1, %s16
      %p119 = scmp.lt.s32.totalorder %s16, 3
      %p120 = pnand %p118, %p119
      %p121 = pneg %p120
      // Predicated region
      $region9: #{tpu_custom_call.1} parent=5 // pred_check
        _
      $region10: #{tpu_custom_call.1} parent=5 // pred_check_branch
        %123 = sbr.rel (%p120) target = $region12
      $region11: #{tpu_custom_call.1} parent=5 // pred_region
        %s124 = ssub.s32 %s16, 1
        // Predicated region
        $region13: #{tpu_custom_call.1} parent=11 // pred_check
          %p125 = pneg %p63
        $region14: #{tpu_custom_call.1} parent=11 // pred_check_branch
          %127 = sbr.rel (%p125) target = $region16
        $region15: #{tpu_custom_call.1} parent=11 // pred_region
          %s129 = ssub.s32 28672, 28672
          %130 = vsyncadd [#allocation6], %s129
          %s131 = sshll.u32 [#allocation5], 4
          %s132 = int_to_ptr.vmem [resolvable:$true] %s131
          %137 = dma.hbm_to_vmem [thread:$0]  %s1, 28672, %s132, [#allocation6], 1792, 1792, 112
        $region16: #{tpu_custom_call.1} parent=11 // pred_fallthru
          _
        // Predicated region
        $region17: #{tpu_custom_call.1} parent=11 // pred_check
          %p138 = pneg %p84
        $region18: #{tpu_custom_call.1} parent=11 // pred_check_branch
          %140 = sbr.rel (%p138) target = $region20
        $region19: #{tpu_custom_call.1} parent=11 // pred_region
          _
        $region20: #{tpu_custom_call.1} parent=11 // pred_fallthru
          _
      $region12: #{tpu_custom_call.1} parent=5 // pred_fallthru
        _
      %p141 = scmp.lt.s32.totalorder %s16, 2
      // Predicated region
      $region21: #{tpu_custom_call.1} parent=5 // pred_check
        %p142 = pneg %p141
      $region22: #{tpu_custom_call.1} parent=5 // pred_check_branch
        %144 = sbr.rel (%p142) target = $region24
      $region23: #{tpu_custom_call.1} parent=5 // pred_region
        // Predicated region
        $region25: #{tpu_custom_call.1} parent=23 // pred_check
          %p145 = pneg %p36
        $region26: #{tpu_custom_call.1} parent=23 // pred_check_branch
          %147 = sbr.rel (%p145) target = $region28
        $region27: #{tpu_custom_call.1} parent=23 // pred_region
          %s148 = sand.u32 %s26, 1
          %s149 = scalar_lea.sflag [#allocation3], %s148
          %s150 = sand.u32 %s26, 1
          %s151 = smul.addr %s150, 8
          %s152 = scalar_lea.vmem [#allocation2], %s151
          %s154 = ssub.s32 128, 128
          %155 = vsyncadd %s149, %s154
          %s156 = smul.addr %s16, 128
          %s157 = scalar_lea.hbm %s0, %s156
          %s159 = sshll.u32 %s152, 4
          %s160 = int_to_ptr.vmem [resolvable:$true] %s159
          %162 = dma.hbm_to_vmem [thread:$0]  %s157, 128, %s160, %s149
        $region28: #{tpu_custom_call.1} parent=23 // pred_fallthru
          _
      $region24: #{tpu_custom_call.1} parent=5 // pred_fallthru
        _
      %p163 = scmp.le.s32.totalorder 1, %s16
      %p164 = scmp.lt.s32.totalorder %s16, 3
      %p165 = pnand %p163, %p164
      %p166 = pneg %p165
      // Predicated region
      $region29: #{tpu_custom_call.1} parent=5 // pred_check
        _
      $region30: #{tpu_custom_call.1} parent=5 // pred_check_branch
        %168 = sbr.rel (%p165) target = $region32
      $region31: #{tpu_custom_call.1} parent=5 // pred_region
        %s169 = ssub.s32 %s16, 1
        %s170 = sand.u32 %s29, 1
        %s171 = scalar_lea.sflag [#allocation3], %s170
        %s172 = sand.u32 %s29, 1
        %s173 = smul.addr %s172, 8
        %s174 = scalar_lea.vmem [#allocation2], %s173
        // Predicated region
        $region33: #{tpu_custom_call.1} parent=31 // pred_check
          %p175 = pneg %p42
        $region34: #{tpu_custom_call.1} parent=31 // pred_check_branch
          %177 = sbr.rel (%p175) target = $region36
        $region35: #{tpu_custom_call.1} parent=31 // pred_region
          %178 = dma.done %s171, 128
        $region36: #{tpu_custom_call.1} parent=31 // pred_fallthru
          _
        // Predicated region
        $region37: #{tpu_custom_call.1} parent=31 // pred_check
          %p179 = pneg %p63
        $region38: #{tpu_custom_call.1} parent=31 // pred_check_branch
          %181 = sbr.rel (%p179) target = $region40
        $region39: #{tpu_custom_call.1} parent=31 // pred_region
          %182 = dma.done [#allocation6], 28672
        $region40: #{tpu_custom_call.1} parent=31 // pred_fallthru
          _
        %s183 = sand.u32 %s29, 1
        %s184 = scalar_lea.sflag [#allocation3], %s183
        %s185 = sand.u32 %s29, 1
        %s186 = smul.addr %s185, 8
        %s187 = scalar_lea.vmem [#allocation2], %s186
        %p188 = pneg %p42
        %p189 = pneg %p39
        %p190 = pneg %p63
        %p191 = pneg %p60
        %p192 = pneg %p84
        %p193 = pneg %p81
        %p194 = pneg %p110
        %p195 = pneg %p107
        %s196 = sand.u32 %s97, 1
        %s197 = scalar_lea.sflag [#allocation4], %s196
        %s198 = sand.u32 %s97, 1
        %s199 = smul.addr %s198, 8
        %s200 = scalar_lea.vmem [#allocation7], %s199
        %v201 = vld [vmem:[%s174] sm:$0xff]
        %v202 = vld [vmem:[#allocation5] sm:$0xff]
        %v203 = vld [vmem:[#allocation5 + $0x8] sm:$0xff]
        %v204 = vld [vmem:[#allocation5 + $0x10] sm:$0xff]
        %v205 = vld [vmem:[#allocation5 + $0x18] sm:$0xff]
        %v206 = vld [vmem:[#allocation5 + $0x20] sm:$0xff]
        %v207 = vld [vmem:[#allocation5 + $0x28] sm:$0xff]
        %v208 = vld [vmem:[#allocation5 + $0x30] sm:$0xff]
        %v209 = vld [vmem:[#allocation5 + $0x38] sm:$0xff]
        %v210 = vld [vmem:[#allocation5 + $0x40] sm:$0xff]
        %v211 = vld [vmem:[#allocation5 + $0x48] sm:$0xff]
        %v212 = vld [vmem:[#allocation5 + $0x50] sm:$0xff]
        %v213 = vld [vmem:[#allocation5 + $0x58] sm:$0xff]
        %v214 = vld [vmem:[#allocation5 + $0x60] sm:$0xff]
        %v215 = vld [vmem:[#allocation5 + $0x68] sm:$0xff]
        %v216 = vld [vmem:[#allocation5 + $0x70] sm:$0xff]
        %v217 = vld [vmem:[#allocation5 + $0x78] sm:$0xff]
        %v218 = vld [vmem:[#allocation5 + $0x80] sm:$0xff]
        %v219 = vld [vmem:[#allocation5 + $0x88] sm:$0xff]
        %v220 = vld [vmem:[#allocation5 + $0x90] sm:$0xff]
        %v221 = vld [vmem:[#allocation5 + $0x98] sm:$0xff]
        %v222 = vld [vmem:[#allocation5 + $0xa0] sm:$0xff]
        %v223 = vld [vmem:[#allocation5 + $0xa8] sm:$0xff]
        %v224 = vld [vmem:[#allocation5 + $0xb0] sm:$0xff]
        %v225 = vld [vmem:[#allocation5 + $0xb8] sm:$0xff]
        %v226 = vld [vmem:[#allocation5 + $0xc0] sm:$0xff]
        %v227 = vld [vmem:[#allocation5 + $0xc8] sm:$0xff]
        %v228 = vld [vmem:[#allocation5 + $0xd0] sm:$0xff]
        %v229 = vld [vmem:[#allocation5 + $0xd8] sm:$0xff]
        %v230 = vld [vmem:[#allocation5 + $0xe0] sm:$0xff]
        %v231 = vld [vmem:[#allocation5 + $0xe8] sm:$0xff]
        %v232 = vld [vmem:[#allocation5 + $0xf0] sm:$0xff]
        %v233 = vld [vmem:[#allocation5 + $0xf8] sm:$0xff]
        %v234 = vld [vmem:[#allocation5 + $0x100] sm:$0xff]
        %v235 = vld [vmem:[#allocation5 + $0x108] sm:$0xff]
        %v236 = vld [vmem:[#allocation5 + $0x110] sm:$0xff]
        %v237 = vld [vmem:[#allocation5 + $0x118] sm:$0xff]
        %v238 = vld [vmem:[#allocation5 + $0x120] sm:$0xff]
        %v239 = vld [vmem:[#allocation5 + $0x128] sm:$0xff]
        %v240 = vld [vmem:[#allocation5 + $0x130] sm:$0xff]
        %v241 = vld [vmem:[#allocation5 + $0x138] sm:$0xff]
        %v242 = vld [vmem:[#allocation5 + $0x140] sm:$0xff]
        %v243 = vld [vmem:[#allocation5 + $0x148] sm:$0xff]
        %v244 = vld [vmem:[#allocation5 + $0x150] sm:$0xff]
        %v245 = vld [vmem:[#allocation5 + $0x158] sm:$0xff]
        %v246 = vld [vmem:[#allocation5 + $0x160] sm:$0xff]
        %v247 = vld [vmem:[#allocation5 + $0x168] sm:$0xff]
        %v248 = vld [vmem:[#allocation5 + $0x170] sm:$0xff]
        %v249 = vld [vmem:[#allocation5 + $0x178] sm:$0xff]
        %v250 = vld [vmem:[#allocation5 + $0x180] sm:$0xff]
        %v251 = vld [vmem:[#allocation5 + $0x188] sm:$0xff]
        %v252 = vld [vmem:[#allocation5 + $0x190] sm:$0xff]
        %v253 = vld [vmem:[#allocation5 + $0x198] sm:$0xff]
        %v254 = vld [vmem:[#allocation5 + $0x1a0] sm:$0xff]
        %v255 = vld [vmem:[#allocation5 + $0x1a8] sm:$0xff]
        %v256 = vld [vmem:[#allocation5 + $0x1b0] sm:$0xff]
        %v257 = vld [vmem:[#allocation5 + $0x1b8] sm:$0xff]
        %v258 = vld [vmem:[#allocation5 + $0x1c0] sm:$0xff]
        %v259 = vld [vmem:[#allocation5 + $0x1c8] sm:$0xff]
        %v260 = vld [vmem:[#allocation5 + $0x1d0] sm:$0xff]
        %v261 = vld [vmem:[#allocation5 + $0x1d8] sm:$0xff]
        %v262 = vld [vmem:[#allocation5 + $0x1e0] sm:$0xff]
        %v263 = vld [vmem:[#allocation5 + $0x1e8] sm:$0xff]
        %v264 = vld [vmem:[#allocation5 + $0x1f0] sm:$0xff]
        %v265 = vld [vmem:[#allocation5 + $0x1f8] sm:$0xff]
        %v266 = vld [vmem:[#allocation5 + $0x200] sm:$0xff]
        %v267 = vld [vmem:[#allocation5 + $0x208] sm:$0xff]
        %v268 = vld [vmem:[#allocation5 + $0x210] sm:$0xff]
        %v269 = vld [vmem:[#allocation5 + $0x218] sm:$0xff]
        %v270 = vld [vmem:[#allocation5 + $0x220] sm:$0xff]
        %v271 = vld [vmem:[#allocation5 + $0x228] sm:$0xff]
        %v272 = vld [vmem:[#allocation5 + $0x230] sm:$0xff]
        %v273 = vld [vmem:[#allocation5 + $0x238] sm:$0xff]
        %v274 = vld [vmem:[#allocation5 + $0x240] sm:$0xff]
        %v275 = vld [vmem:[#allocation5 + $0x248] sm:$0xff]
        %v276 = vld [vmem:[#allocation5 + $0x250] sm:$0xff]
        %v277 = vld [vmem:[#allocation5 + $0x258] sm:$0xff]
        %v278 = vld [vmem:[#allocation5 + $0x260] sm:$0xff]
        %v279 = vld [vmem:[#allocation5 + $0x268] sm:$0xff]
        %v280 = vld [vmem:[#allocation5 + $0x270] sm:$0xff]
        %v281 = vld [vmem:[#allocation5 + $0x278] sm:$0xff]
        %v282 = vld [vmem:[#allocation5 + $0x280] sm:$0xff]
        %v283 = vld [vmem:[#allocation5 + $0x288] sm:$0xff]
        %v284 = vld [vmem:[#allocation5 + $0x290] sm:$0xff]
        %v285 = vld [vmem:[#allocation5 + $0x298] sm:$0xff]
        %v286 = vld [vmem:[#allocation5 + $0x2a0] sm:$0xff]
        %v287 = vld [vmem:[#allocation5 + $0x2a8] sm:$0xff]
        %v288 = vld [vmem:[#allocation5 + $0x2b0] sm:$0xff]
        %v289 = vld [vmem:[#allocation5 + $0x2b8] sm:$0xff]
        %v290 = vld [vmem:[#allocation5 + $0x2c0] sm:$0xff]
        %v291 = vld [vmem:[#allocation5 + $0x2c8] sm:$0xff]
        %v292 = vld [vmem:[#allocation5 + $0x2d0] sm:$0xff]
        %v293 = vld [vmem:[#allocation5 + $0x2d8] sm:$0xff]
        %v294 = vld [vmem:[#allocation5 + $0x2e0] sm:$0xff]
        %v295 = vld [vmem:[#allocation5 + $0x2e8] sm:$0xff]
        %v296 = vld [vmem:[#allocation5 + $0x2f0] sm:$0xff]
        %v297 = vld [vmem:[#allocation5 + $0x2f8] sm:$0xff]
        %v298 = vld [vmem:[#allocation5 + $0x300] sm:$0xff]
        %v299 = vld [vmem:[#allocation5 + $0x308] sm:$0xff]
        %v300 = vld [vmem:[#allocation5 + $0x310] sm:$0xff]
        %v301 = vld [vmem:[#allocation5 + $0x318] sm:$0xff]
        %v302 = vld [vmem:[#allocation5 + $0x320] sm:$0xff]
        %v303 = vld [vmem:[#allocation5 + $0x328] sm:$0xff]
        %v304 = vld [vmem:[#allocation5 + $0x330] sm:$0xff]
        %v305 = vld [vmem:[#allocation5 + $0x338] sm:$0xff]
        %v306 = vld [vmem:[#allocation5 + $0x340] sm:$0xff]
        %v307 = vld [vmem:[#allocation5 + $0x348] sm:$0xff]
        %v308 = vld [vmem:[#allocation5 + $0x350] sm:$0xff]
        %v309 = vld [vmem:[#allocation5 + $0x358] sm:$0xff]
        %v310 = vld [vmem:[#allocation5 + $0x360] sm:$0xff]
        %v311 = vld [vmem:[#allocation5 + $0x368] sm:$0xff]
        %v312 = vld [vmem:[#allocation5 + $0x370] sm:$0xff]
        %v313 = vld [vmem:[#allocation5 + $0x378] sm:$0xff]
        %v314 = vld [vmem:[#allocation5 + $0x380] sm:$0xff]
        %v315 = vld [vmem:[#allocation5 + $0x388] sm:$0xff]
        %v316 = vld [vmem:[#allocation5 + $0x390] sm:$0xff]
        %v317 = vld [vmem:[#allocation5 + $0x398] sm:$0xff]
        %v318 = vld [vmem:[#allocation5 + $0x3a0] sm:$0xff]
        %v319 = vld [vmem:[#allocation5 + $0x3a8] sm:$0xff]
        %v320 = vld [vmem:[#allocation5 + $0x3b0] sm:$0xff]
        %v321 = vld [vmem:[#allocation5 + $0x3b8] sm:$0xff]
        %v322 = vld [vmem:[#allocation5 + $0x3c0] sm:$0xff]
        %v323 = vld [vmem:[#allocation5 + $0x3c8] sm:$0xff]
        %v324 = vld [vmem:[#allocation5 + $0x3d0] sm:$0xff]
        %v325 = vld [vmem:[#allocation5 + $0x3d8] sm:$0xff]
        %v326 = vld [vmem:[#allocation5 + $0x3e0] sm:$0xff]
        %v327 = vld [vmem:[#allocation5 + $0x3e8] sm:$0xff]
        %v328 = vld [vmem:[#allocation5 + $0x3f0] sm:$0xff]
        %v329 = vld [vmem:[#allocation5 + $0x3f8] sm:$0xff]
        %v330 = vld [vmem:[#allocation5 + $0x400] sm:$0xff]
        %v331 = vld [vmem:[#allocation5 + $0x408] sm:$0xff]
        %v332 = vld [vmem:[#allocation5 + $0x410] sm:$0xff]
        %v333 = vld [vmem:[#allocation5 + $0x418] sm:$0xff]
        %v334 = vld [vmem:[#allocation5 + $0x420] sm:$0xff]
        %v335 = vld [vmem:[#allocation5 + $0x428] sm:$0xff]
        %v336 = vld [vmem:[#allocation5 + $0x430] sm:$0xff]
        %v337 = vld [vmem:[#allocation5 + $0x438] sm:$0xff]
        %v338 = vld [vmem:[#allocation5 + $0x440] sm:$0xff]
        %v339 = vld [vmem:[#allocation5 + $0x448] sm:$0xff]
        %v340 = vld [vmem:[#allocation5 + $0x450] sm:$0xff]
        %v341 = vld [vmem:[#allocation5 + $0x458] sm:$0xff]
        %v342 = vld [vmem:[#allocation5 + $0x460] sm:$0xff]
        %v343 = vld [vmem:[#allocation5 + $0x468] sm:$0xff]
        %v344 = vld [vmem:[#allocation5 + $0x470] sm:$0xff]
        %v345 = vld [vmem:[#allocation5 + $0x478] sm:$0xff]
        %v346 = vld [vmem:[#allocation5 + $0x480] sm:$0xff]
        %v347 = vld [vmem:[#allocation5 + $0x488] sm:$0xff]
        %v348 = vld [vmem:[#allocation5 + $0x490] sm:$0xff]
        %v349 = vld [vmem:[#allocation5 + $0x498] sm:$0xff]
        %v350 = vld [vmem:[#allocation5 + $0x4a0] sm:$0xff]
        %v351 = vld [vmem:[#allocation5 + $0x4a8] sm:$0xff]
        %v352 = vld [vmem:[#allocation5 + $0x4b0] sm:$0xff]
        %v353 = vld [vmem:[#allocation5 + $0x4b8] sm:$0xff]
        %v354 = vld [vmem:[#allocation5 + $0x4c0] sm:$0xff]
        %v355 = vld [vmem:[#allocation5 + $0x4c8] sm:$0xff]
        %v356 = vld [vmem:[#allocation5 + $0x4d0] sm:$0xff]
        %v357 = vld [vmem:[#allocation5 + $0x4d8] sm:$0xff]
        %v358 = vld [vmem:[#allocation5 + $0x4e0] sm:$0xff]
        %v359 = vld [vmem:[#allocation5 + $0x4e8] sm:$0xff]
        %v360 = vld [vmem:[#allocation5 + $0x4f0] sm:$0xff]
        %v361 = vld [vmem:[#allocation5 + $0x4f8] sm:$0xff]
        %v362 = vld [vmem:[#allocation5 + $0x500] sm:$0xff]
        %v363 = vld [vmem:[#allocation5 + $0x508] sm:$0xff]
        %v364 = vld [vmem:[#allocation5 + $0x510] sm:$0xff]
        %v365 = vld [vmem:[#allocation5 + $0x518] sm:$0xff]
        %v366 = vld [vmem:[#allocation5 + $0x520] sm:$0xff]
        %v367 = vld [vmem:[#allocation5 + $0x528] sm:$0xff]
        %v368 = vld [vmem:[#allocation5 + $0x530] sm:$0xff]
        %v369 = vld [vmem:[#allocation5 + $0x538] sm:$0xff]
        %v370 = vld [vmem:[#allocation5 + $0x540] sm:$0xff]
        %v371 = vld [vmem:[#allocation5 + $0x548] sm:$0xff]
        %v372 = vld [vmem:[#allocation5 + $0x550] sm:$0xff]
        %v373 = vld [vmem:[#allocation5 + $0x558] sm:$0xff]
        %v374 = vld [vmem:[#allocation5 + $0x560] sm:$0xff]
        %v375 = vld [vmem:[#allocation5 + $0x568] sm:$0xff]
        %v376 = vld [vmem:[#allocation5 + $0x570] sm:$0xff]
        %v377 = vld [vmem:[#allocation5 + $0x578] sm:$0xff]
        %v378 = vld [vmem:[#allocation5 + $0x580] sm:$0xff]
        %v379 = vld [vmem:[#allocation5 + $0x588] sm:$0xff]
        %v380 = vld [vmem:[#allocation5 + $0x590] sm:$0xff]
        %v381 = vld [vmem:[#allocation5 + $0x598] sm:$0xff]
        %v382 = vld [vmem:[#allocation5 + $0x5a0] sm:$0xff]
        %v383 = vld [vmem:[#allocation5 + $0x5a8] sm:$0xff]
        %v384 = vld [vmem:[#allocation5 + $0x5b0] sm:$0xff]
        %v385 = vld [vmem:[#allocation5 + $0x5b8] sm:$0xff]
        %v386 = vld [vmem:[#allocation5 + $0x5c0] sm:$0xff]
        %v387 = vld [vmem:[#allocation5 + $0x5c8] sm:$0xff]
        %v388 = vld [vmem:[#allocation5 + $0x5d0] sm:$0xff]
        %v389 = vld [vmem:[#allocation5 + $0x5d8] sm:$0xff]
        %v390 = vld [vmem:[#allocation5 + $0x5e0] sm:$0xff]
        %v391 = vld [vmem:[#allocation5 + $0x5e8] sm:$0xff]
        %v392 = vld [vmem:[#allocation5 + $0x5f0] sm:$0xff]
        %v393 = vld [vmem:[#allocation5 + $0x5f8] sm:$0xff]
        %v394 = vld [vmem:[#allocation5 + $0x600] sm:$0xff]
        %v395 = vld [vmem:[#allocation5 + $0x608] sm:$0xff]
        %v396 = vld [vmem:[#allocation5 + $0x610] sm:$0xff]
        %v397 = vld [vmem:[#allocation5 + $0x618] sm:$0xff]
        %v398 = vld [vmem:[#allocation5 + $0x620] sm:$0xff]
        %v399 = vld [vmem:[#allocation5 + $0x628] sm:$0xff]
        %v400 = vld [vmem:[#allocation5 + $0x630] sm:$0xff]
        %v401 = vld [vmem:[#allocation5 + $0x638] sm:$0xff]
        %v402 = vld [vmem:[#allocation5 + $0x640] sm:$0xff]
        %v403 = vld [vmem:[#allocation5 + $0x648] sm:$0xff]
        %v404 = vld [vmem:[#allocation5 + $0x650] sm:$0xff]
        %v405 = vld [vmem:[#allocation5 + $0x658] sm:$0xff]
        %v406 = vld [vmem:[#allocation5 + $0x660] sm:$0xff]
        %v407 = vld [vmem:[#allocation5 + $0x668] sm:$0xff]
        %v408 = vld [vmem:[#allocation5 + $0x670] sm:$0xff]
        %v409 = vld [vmem:[#allocation5 + $0x678] sm:$0xff]
        %v410 = vld [vmem:[#allocation5 + $0x680] sm:$0xff]
        %v411 = vld [vmem:[#allocation5 + $0x688] sm:$0xff]
        %v412 = vld [vmem:[#allocation5 + $0x690] sm:$0xff]
        %v413 = vld [vmem:[#allocation5 + $0x698] sm:$0xff]
        %v414 = vld [vmem:[#allocation5 + $0x6a0] sm:$0xff]
        %v415 = vld [vmem:[#allocation5 + $0x6a8] sm:$0xff]
        %v416 = vld [vmem:[#allocation5 + $0x6b0] sm:$0xff]
        %v417 = vld [vmem:[#allocation5 + $0x6b8] sm:$0xff]
        %v418 = vld [vmem:[#allocation5 + $0x6c0] sm:$0xff]
        %v419 = vld [vmem:[#allocation5 + $0x6c8] sm:$0xff]
        %v420 = vld [vmem:[#allocation5 + $0x6d0] sm:$0xff]
        %v421 = vld [vmem:[#allocation5 + $0x6d8] sm:$0xff]
        %v422 = vld [vmem:[#allocation5 + $0x6e0] sm:$0xff]
        %v423 = vld [vmem:[#allocation5 + $0x6e8] sm:$0xff]
        %v424 = vld [vmem:[#allocation5 + $0x6f0] sm:$0xff]
        %v425 = vld [vmem:[#allocation5 + $0x6f8] sm:$0xff]
        %426 = vmatprep.subr.mxu0 %v413
        %427 = vmatpush1.msra.mxu0 %v412
        %428 = vmatprep.subr.mxu0 %v399
        %429 = vmatpush1.msra.mxu0 %v398
        %430 = vmatprep.subr.mxu0 %v385
        %431 = vmatpush1.msra.mxu0 %v384
        %432 = vmatprep.subr.mxu0 %v371
        %433 = vmatpush1.msra.mxu0 %v370
        %434 = vmatprep.subr.mxu0 %v357
        %435 = vmatpush1.msra.mxu0 %v356
        %436 = vmatprep.subr.mxu0 %v343
        %437 = vmatpush1.msra.mxu0 %v342
        %438 = vmatprep.subr.mxu0 %v329
        %439 = vmatpush1.msra.mxu0 %v328
        %440 = vmatprep.subr.mxu0 %v315
        %441 = vmatpush1.msra.mxu0 %v314
        %442 = vmatprep.subr.mxu0 %v301
        %443 = vmatpush1.msra.mxu0 %v300
        %444 = vmatprep.subr.mxu0 %v287
        %445 = vmatpush1.msra.mxu0 %v286
        %446 = vmatprep.subr.mxu0 %v273
        %447 = vmatpush1.msra.mxu0 %v272
        %448 = vmatprep.subr.mxu0 %v259
        %449 = vmatpush1.msra.mxu0 %v258
        %450 = vmatprep.subr.mxu0 %v245
        %451 = vmatpush1.msra.mxu0 %v244
        %452 = vmatprep.subr.mxu0 %v231
        %453 = vmatpush1.msra.mxu0 %v230
        %454 = vmatprep.subr.mxu0 %v217
        %455 = vmatpush1.msra.mxu0 %v216
        %456 = vmatprep.subr.mxu0 %v203
        %457 = vmatpush1.msra.mxu0 %v202
        %458 = vmatprep.subr.mxu0 0.0
        %459 = vmatpush2.msra.mxu0 0.0
        %460 = vmatprep.subr.mxu0 0.0
        %461 = vmatpush2.msra.mxu0 0.0
        %462 = vmatprep.subr.mxu0 0.0
        %463 = vmatpush2.msra.mxu0 0.0
        %464 = vmatprep.subr.mxu0 0.0
        %465 = vmatpush2.msra.mxu0 0.0
        %466 = vmatprep.subr.mxu0 0.0
        %467 = vmatpush2.msra.mxu0 0.0
        %468 = vmatprep.subr.mxu0 0.0
        %469 = vmatpush2.msra.mxu0 0.0
        %470 = vmatprep.subr.mxu0 0.0
        %471 = vmatpush2.msra.mxu0 0.0
        %472 = vmatprep.subr.mxu0 0.0
        %473 = vmatpush2.msra.mxu0 0.0
        %474 = vmatprep.subr.mxu0 0.0
        %475 = vmatpush2.msra.mxu0 0.0
        %476 = vmatprep.subr.mxu0 0.0
        %477 = vmatpush2.msra.mxu0 0.0
        %478 = vmatprep.subr.mxu0 0.0
        %479 = vmatpush2.msra.mxu0 0.0
        %480 = vmatprep.subr.mxu0 0.0
        %481 = vmatpush2.msra.mxu0 0.0
        %482 = vmatprep.subr.mxu0 0.0
        %483 = vmatpush2.msra.mxu0 0.0
        %484 = vmatprep.subr.mxu0 0.0
        %485 = vmatpush2.msra.mxu0 0.0
        %486 = vmatprep.subr.mxu0 0.0
        %487 = vmatpush2.msra.mxu0 0.0
        %488 = vmatprep.subr.mxu0 0.0
        %489 = vmatpush2.msra.mxu0 0.0
        %490 = vmatprep.mubr.f32.mxu0 0.0
        %491 = vmatmul.mubr.f32.gmra.mxu0 %v201
        %v492 = vpop.f32.mrf.mxu0
        %v493 = vadd.f32 0.0, %v492
        %v494 = vpop.f32.mrf.mxu0
        %v495 = vadd.f32 0.0, %v494
        %496 = vdwg.mxu0
        %497 = vmatprep.subr.mxu0 %v415
        %498 = vmatpush1.msra.mxu0 %v414
        %499 = vmatprep.subr.mxu0 %v401
        %500 = vmatpush1.msra.mxu0 %v400
        %501 = vmatprep.subr.mxu0 %v387
        %502 = vmatpush1.msra.mxu0 %v386
        %503 = vmatprep.subr.mxu0 %v373
        %504 = vmatpush1.msra.mxu0 %v372
        %505 = vmatprep.subr.mxu0 %v359
        %506 = vmatpush1.msra.mxu0 %v358
        %507 = vmatprep.subr.mxu0 %v345
        %508 = vmatpush1.msra.mxu0 %v344
        %509 = vmatprep.subr.mxu0 %v331
        %510 = vmatpush1.msra.mxu0 %v330
        %511 = vmatprep.subr.mxu0 %v317
        %512 = vmatpush1.msra.mxu0 %v316
        %513 = vmatprep.subr.mxu0 %v303
        %514 = vmatpush1.msra.mxu0 %v302
        %515 = vmatprep.subr.mxu0 %v289
        %516 = vmatpush1.msra.mxu0 %v288
        %517 = vmatprep.subr.mxu0 %v275
        %518 = vmatpush1.msra.mxu0 %v274
        %519 = vmatprep.subr.mxu0 %v261
        %520 = vmatpush1.msra.mxu0 %v260
        %521 = vmatprep.subr.mxu0 %v247
        %522 = vmatpush1.msra.mxu0 %v246
        %523 = vmatprep.subr.mxu0 %v233
        %524 = vmatpush1.msra.mxu0 %v232
        %525 = vmatprep.subr.mxu0 %v219
        %526 = vmatpush1.msra.mxu0 %v218
        %527 = vmatprep.subr.mxu0 %v205
        %528 = vmatpush1.msra.mxu0 %v204
        %529 = vmatprep.subr.mxu0 0.0
        %530 = vmatpush2.msra.mxu0 0.0
        %531 = vmatprep.subr.mxu0 0.0
        %532 = vmatpush2.msra.mxu0 0.0
        %533 = vmatprep.subr.mxu0 0.0
        %534 = vmatpush2.msra.mxu0 0.0
        %535 = vmatprep.subr.mxu0 0.0
        %536 = vmatpush2.msra.mxu0 0.0
        %537 = vmatprep.subr.mxu0 0.0
        %538 = vmatpush2.msra.mxu0 0.0
        %539 = vmatprep.subr.mxu0 0.0
        %540 = vmatpush2.msra.mxu0 0.0
        %541 = vmatprep.subr.mxu0 0.0
        %542 = vmatpush2.msra.mxu0 0.0
        %543 = vmatprep.subr.mxu0 0.0
        %544 = vmatpush2.msra.mxu0 0.0
        %545 = vmatprep.subr.mxu0 0.0
        %546 = vmatpush2.msra.mxu0 0.0
        %547 = vmatprep.subr.mxu0 0.0
        %548 = vmatpush2.msra.mxu0 0.0
        %549 = vmatprep.subr.mxu0 0.0
        %550 = vmatpush2.msra.mxu0 0.0
        %551 = vmatprep.subr.mxu0 0.0
        %552 = vmatpush2.msra.mxu0 0.0
        %553 = vmatprep.subr.mxu0 0.0
        %554 = vmatpush2.msra.mxu0 0.0
        %555 = vmatprep.subr.mxu0 0.0
        %556 = vmatpush2.msra.mxu0 0.0
        %557 = vmatprep.subr.mxu0 0.0
        %558 = vmatpush2.msra.mxu0 0.0
        %559 = vmatprep.subr.mxu0 0.0
        %560 = vmatpush2.msra.mxu0 0.0
        %561 = vmatprep.mubr.f32.mxu0 0.0
        %562 = vmatmul.mubr.f32.gmra.mxu0 %v201
        %v563 = vpop.f32.mrf.mxu0
        %v564 = vadd.f32 0.0, %v563
        %v565 = vpop.f32.mrf.mxu0
        %v566 = vadd.f32 0.0, %v565
        %567 = vdwg.mxu0
        %568 = vmatprep.subr.mxu0 %v417
        %569 = vmatpush1.msra.mxu0 %v416
        %570 = vmatprep.subr.mxu0 %v403
        %571 = vmatpush1.msra.mxu0 %v402
        %572 = vmatprep.subr.mxu0 %v389
        %573 = vmatpush1.msra.mxu0 %v388
        %574 = vmatprep.subr.mxu0 %v375
        %575 = vmatpush1.msra.mxu0 %v374
        %576 = vmatprep.subr.mxu0 %v361
        %577 = vmatpush1.msra.mxu0 %v360
        %578 = vmatprep.subr.mxu0 %v347
        %579 = vmatpush1.msra.mxu0 %v346
        %580 = vmatprep.subr.mxu0 %v333
        %581 = vmatpush1.msra.mxu0 %v332
        %582 = vmatprep.subr.mxu0 %v319
        %583 = vmatpush1.msra.mxu0 %v318
        %584 = vmatprep.subr.mxu0 %v305
        %585 = vmatpush1.msra.mxu0 %v304
        %586 = vmatprep.subr.mxu0 %v291
        %587 = vmatpush1.msra.mxu0 %v290
        %588 = vmatprep.subr.mxu0 %v277
        %589 = vmatpush1.msra.mxu0 %v276
        %590 = vmatprep.subr.mxu0 %v263
        %591 = vmatpush1.msra.mxu0 %v262
        %592 = vmatprep.subr.mxu0 %v249
        %593 = vmatpush1.msra.mxu0 %v248
        %594 = vmatprep.subr.mxu0 %v235
        %595 = vmatpush1.msra.mxu0 %v234
        %596 = vmatprep.subr.mxu0 %v221
        %597 = vmatpush1.msra.mxu0 %v220
        %598 = vmatprep.subr.mxu0 %v207
        %599 = vmatpush1.msra.mxu0 %v206
        %600 = vmatprep.subr.mxu0 0.0
        %601 = vmatpush2.msra.mxu0 0.0
        %602 = vmatprep.subr.mxu0 0.0
        %603 = vmatpush2.msra.mxu0 0.0
        %604 = vmatprep.subr.mxu0 0.0
        %605 = vmatpush2.msra.mxu0 0.0
        %606 = vmatprep.subr.mxu0 0.0
        %607 = vmatpush2.msra.mxu0 0.0
        %608 = vmatprep.subr.mxu0 0.0
        %609 = vmatpush2.msra.mxu0 0.0
        %610 = vmatprep.subr.mxu0 0.0
        %611 = vmatpush2.msra.mxu0 0.0
        %612 = vmatprep.subr.mxu0 0.0
        %613 = vmatpush2.msra.mxu0 0.0
        %614 = vmatprep.subr.mxu0 0.0
        %615 = vmatpush2.msra.mxu0 0.0
        %616 = vmatprep.subr.mxu0 0.0
        %617 = vmatpush2.msra.mxu0 0.0
        %618 = vmatprep.subr.mxu0 0.0
        %619 = vmatpush2.msra.mxu0 0.0
        %620 = vmatprep.subr.mxu0 0.0
        %621 = vmatpush2.msra.mxu0 0.0
        %622 = vmatprep.subr.mxu0 0.0
        %623 = vmatpush2.msra.mxu0 0.0
        %624 = vmatprep.subr.mxu0 0.0
        %625 = vmatpush2.msra.mxu0 0.0
        %626 = vmatprep.subr.mxu0 0.0
        %627 = vmatpush2.msra.mxu0 0.0
        %628 = vmatprep.subr.mxu0 0.0
        %629 = vmatpush2.msra.mxu0 0.0
        %630 = vmatprep.subr.mxu0 0.0
        %631 = vmatpush2.msra.mxu0 0.0
        %632 = vmatprep.mubr.f32.mxu0 0.0
        %633 = vmatmul.mubr.f32.gmra.mxu0 %v201
        %v634 = vpop.f32.mrf.mxu0
        %v635 = vadd.f32 0.0, %v634
        %v636 = vpop.f32.mrf.mxu0
        %v637 = vadd.f32 0.0, %v636
        %638 = vdwg.mxu0
        %639 = vmatprep.subr.mxu0 %v419
        %640 = vmatpush1.msra.mxu0 %v418
        %641 = vmatprep.subr.mxu0 %v405
        %642 = vmatpush1.msra.mxu0 %v404
        %643 = vmatprep.subr.mxu0 %v391
        %644 = vmatpush1.msra.mxu0 %v390
        %645 = vmatprep.subr.mxu0 %v377
        %646 = vmatpush1.msra.mxu0 %v376
        %647 = vmatprep.subr.mxu0 %v363
        %648 = vmatpush1.msra.mxu0 %v362
        %649 = vmatprep.subr.mxu0 %v349
        %650 = vmatpush1.msra.mxu0 %v348
        %651 = vmatprep.subr.mxu0 %v335
        %652 = vmatpush1.msra.mxu0 %v334
        %653 = vmatprep.subr.mxu0 %v321
        %654 = vmatpush1.msra.mxu0 %v320
        %655 = vmatprep.subr.mxu0 %v307
        %656 = vmatpush1.msra.mxu0 %v306
        %657 = vmatprep.subr.mxu0 %v293
        %658 = vmatpush1.msra.mxu0 %v292
        %659 = vmatprep.subr.mxu0 %v279
        %660 = vmatpush1.msra.mxu0 %v278
        %661 = vmatprep.subr.mxu0 %v265
        %662 = vmatpush1.msra.mxu0 %v264
        %663 = vmatprep.subr.mxu0 %v251
        %664 = vmatpush1.msra.mxu0 %v250
        %665 = vmatprep.subr.mxu0 %v237
        %666 = vmatpush1.msra.mxu0 %v236
        %667 = vmatprep.subr.mxu0 %v223
        %668 = vmatpush1.msra.mxu0 %v222
        %669 = vmatprep.subr.mxu0 %v209
        %670 = vmatpush1.msra.mxu0 %v208
        %671 = vmatprep.subr.mxu0 0.0
        %672 = vmatpush2.msra.mxu0 0.0
        %673 = vmatprep.subr.mxu0 0.0
        %674 = vmatpush2.msra.mxu0 0.0
        %675 = vmatprep.subr.mxu0 0.0
        %676 = vmatpush2.msra.mxu0 0.0
        %677 = vmatprep.subr.mxu0 0.0
        %678 = vmatpush2.msra.mxu0 0.0
        %679 = vmatprep.subr.mxu0 0.0
        %680 = vmatpush2.msra.mxu0 0.0
        %681 = vmatprep.subr.mxu0 0.0
        %682 = vmatpush2.msra.mxu0 0.0
        %683 = vmatprep.subr.mxu0 0.0
        %684 = vmatpush2.msra.mxu0 0.0
        %685 = vmatprep.subr.mxu0 0.0
        %686 = vmatpush2.msra.mxu0 0.0
        %687 = vmatprep.subr.mxu0 0.0
        %688 = vmatpush2.msra.mxu0 0.0
        %689 = vmatprep.subr.mxu0 0.0
        %690 = vmatpush2.msra.mxu0 0.0
        %691 = vmatprep.subr.mxu0 0.0
        %692 = vmatpush2.msra.mxu0 0.0
        %693 = vmatprep.subr.mxu0 0.0
        %694 = vmatpush2.msra.mxu0 0.0
        %695 = vmatprep.subr.mxu0 0.0
        %696 = vmatpush2.msra.mxu0 0.0
        %697 = vmatprep.subr.mxu0 0.0
        %698 = vmatpush2.msra.mxu0 0.0
        %699 = vmatprep.subr.mxu0 0.0
        %700 = vmatpush2.msra.mxu0 0.0
        %701 = vmatprep.subr.mxu0 0.0
        %702 = vmatpush2.msra.mxu0 0.0
        %703 = vmatprep.mubr.f32.mxu0 0.0
        %704 = vmatmul.mubr.f32.gmra.mxu0 %v201
        %v705 = vpop.f32.mrf.mxu0
        %v706 = vadd.f32 0.0, %v705
        %v707 = vpop.f32.mrf.mxu0
        %v708 = vadd.f32 0.0, %v707
        %709 = vdwg.mxu0
        %710 = vmatprep.subr.mxu0 %v421
        %711 = vmatpush1.msra.mxu0 %v420
        %712 = vmatprep.subr.mxu0 %v407
        %713 = vmatpush1.msra.mxu0 %v406
        %714 = vmatprep.subr.mxu0 %v393
        %715 = vmatpush1.msra.mxu0 %v392
        %716 = vmatprep.subr.mxu0 %v379
        %717 = vmatpush1.msra.mxu0 %v378
        %718 = vmatprep.subr.mxu0 %v365
        %719 = vmatpush1.msra.mxu0 %v364
        %720 = vmatprep.subr.mxu0 %v351
        %721 = vmatpush1.msra.mxu0 %v350
        %722 = vmatprep.subr.mxu0 %v337
        %723 = vmatpush1.msra.mxu0 %v336
        %724 = vmatprep.subr.mxu0 %v323
        %725 = vmatpush1.msra.mxu0 %v322
        %726 = vmatprep.subr.mxu0 %v309
        %727 = vmatpush1.msra.mxu0 %v308
        %728 = vmatprep.subr.mxu0 %v295
        %729 = vmatpush1.msra.mxu0 %v294
        %730 = vmatprep.subr.mxu0 %v281
        %731 = vmatpush1.msra.mxu0 %v280
        %732 = vmatprep.subr.mxu0 %v267
        %733 = vmatpush1.msra.mxu0 %v266
        %734 = vmatprep.subr.mxu0 %v253
        %735 = vmatpush1.msra.mxu0 %v252
        %736 = vmatprep.subr.mxu0 %v239
        %737 = vmatpush1.msra.mxu0 %v238
        %738 = vmatprep.subr.mxu0 %v225
        %739 = vmatpush1.msra.mxu0 %v224
        %740 = vmatprep.subr.mxu0 %v211
        %741 = vmatpush1.msra.mxu0 %v210
        %742 = vmatprep.subr.mxu0 0.0
        %743 = vmatpush2.msra.mxu0 0.0
        %744 = vmatprep.subr.mxu0 0.0
        %745 = vmatpush2.msra.mxu0 0.0
        %746 = vmatprep.subr.mxu0 0.0
        %747 = vmatpush2.msra.mxu0 0.0
        %748 = vmatprep.subr.mxu0 0.0
        %749 = vmatpush2.msra.mxu0 0.0
        %750 = vmatprep.subr.mxu0 0.0
        %751 = vmatpush2.msra.mxu0 0.0
        %752 = vmatprep.subr.mxu0 0.0
        %753 = vmatpush2.msra.mxu0 0.0
        %754 = vmatprep.subr.mxu0 0.0
        %755 = vmatpush2.msra.mxu0 0.0
        %756 = vmatprep.subr.mxu0 0.0
        %757 = vmatpush2.msra.mxu0 0.0
        %758 = vmatprep.subr.mxu0 0.0
        %759 = vmatpush2.msra.mxu0 0.0
        %760 = vmatprep.subr.mxu0 0.0
        %761 = vmatpush2.msra.mxu0 0.0
        %762 = vmatprep.subr.mxu0 0.0
        %763 = vmatpush2.msra.mxu0 0.0
        %764 = vmatprep.subr.mxu0 0.0
        %765 = vmatpush2.msra.mxu0 0.0
        %766 = vmatprep.subr.mxu0 0.0
        %767 = vmatpush2.msra.mxu0 0.0
        %768 = vmatprep.subr.mxu0 0.0
        %769 = vmatpush2.msra.mxu0 0.0
        %770 = vmatprep.subr.mxu0 0.0
        %771 = vmatpush2.msra.mxu0 0.0
        %772 = vmatprep.subr.mxu0 0.0
        %773 = vmatpush2.msra.mxu0 0.0
        %774 = vmatprep.mubr.f32.mxu0 0.0
        %775 = vmatmul.mubr.f32.gmra.mxu0 %v201
        %v776 = vpop.f32.mrf.mxu0
        %v777 = vadd.f32 0.0, %v776
        %v778 = vpop.f32.mrf.mxu0
        %v779 = vadd.f32 0.0, %v778
        %780 = vdwg.mxu0
        %781 = vmatprep.subr.mxu0 %v423
        %782 = vmatpush1.msra.mxu0 %v422
        %783 = vmatprep.subr.mxu0 %v409
        %784 = vmatpush1.msra.mxu0 %v408
        %785 = vmatprep.subr.mxu0 %v395
        %786 = vmatpush1.msra.mxu0 %v394
        %787 = vmatprep.subr.mxu0 %v381
        %788 = vmatpush1.msra.mxu0 %v380
        %789 = vmatprep.subr.mxu0 %v367
        %790 = vmatpush1.msra.mxu0 %v366
        %791 = vmatprep.subr.mxu0 %v353
        %792 = vmatpush1.msra.mxu0 %v352
        %793 = vmatprep.subr.mxu0 %v339
        %794 = vmatpush1.msra.mxu0 %v338
        %795 = vmatprep.subr.mxu0 %v325
        %796 = vmatpush1.msra.mxu0 %v324
        %797 = vmatprep.subr.mxu0 %v311
        %798 = vmatpush1.msra.mxu0 %v310
        %799 = vmatprep.subr.mxu0 %v297
        %800 = vmatpush1.msra.mxu0 %v296
        %801 = vmatprep.subr.mxu0 %v283
        %802 = vmatpush1.msra.mxu0 %v282
        %803 = vmatprep.subr.mxu0 %v269
        %804 = vmatpush1.msra.mxu0 %v268
        %805 = vmatprep.subr.mxu0 %v255
        %806 = vmatpush1.msra.mxu0 %v254
        %807 = vmatprep.subr.mxu0 %v241
        %808 = vmatpush1.msra.mxu0 %v240
        %809 = vmatprep.subr.mxu0 %v227
        %810 = vmatpush1.msra.mxu0 %v226
        %811 = vmatprep.subr.mxu0 %v213
        %812 = vmatpush1.msra.mxu0 %v212
        %813 = vmatprep.subr.mxu0 0.0
        %814 = vmatpush2.msra.mxu0 0.0
        %815 = vmatprep.subr.mxu0 0.0
        %816 = vmatpush2.msra.mxu0 0.0
        %817 = vmatprep.subr.mxu0 0.0
        %818 = vmatpush2.msra.mxu0 0.0
        %819 = vmatprep.subr.mxu0 0.0
        %820 = vmatpush2.msra.mxu0 0.0
        %821 = vmatprep.subr.mxu0 0.0
        %822 = vmatpush2.msra.mxu0 0.0
        %823 = vmatprep.subr.mxu0 0.0
        %824 = vmatpush2.msra.mxu0 0.0
        %825 = vmatprep.subr.mxu0 0.0
        %826 = vmatpush2.msra.mxu0 0.0
        %827 = vmatprep.subr.mxu0 0.0
        %828 = vmatpush2.msra.mxu0 0.0
        %829 = vmatprep.subr.mxu0 0.0
        %830 = vmatpush2.msra.mxu0 0.0
        %831 = vmatprep.subr.mxu0 0.0
        %832 = vmatpush2.msra.mxu0 0.0
        %833 = vmatprep.subr.mxu0 0.0
        %834 = vmatpush2.msra.mxu0 0.0
        %835 = vmatprep.subr.mxu0 0.0
        %836 = vmatpush2.msra.mxu0 0.0
        %837 = vmatprep.subr.mxu0 0.0
        %838 = vmatpush2.msra.mxu0 0.0
        %839 = vmatprep.subr.mxu0 0.0
        %840 = vmatpush2.msra.mxu0 0.0
        %841 = vmatprep.subr.mxu0 0.0
        %842 = vmatpush2.msra.mxu0 0.0
        %843 = vmatprep.subr.mxu0 0.0
        %844 = vmatpush2.msra.mxu0 0.0
        %845 = vmatprep.mubr.f32.mxu0 0.0
        %846 = vmatmul.mubr.f32.gmra.mxu0 %v201
        %v847 = vpop.f32.mrf.mxu0
        %v848 = vadd.f32 0.0, %v847
        %v849 = vpop.f32.mrf.mxu0
        %v850 = vadd.f32 0.0, %v849
        %851 = vdwg.mxu0
        %852 = vmatprep.subr.mxu0 %v425
        %853 = vmatpush1.msra.mxu0 %v424
        %854 = vmatprep.subr.mxu0 %v411
        %855 = vmatpush1.msra.mxu0 %v410
        %856 = vmatprep.subr.mxu0 %v397
        %857 = vmatpush1.msra.mxu0 %v396
        %858 = vmatprep.subr.mxu0 %v383
        %859 = vmatpush1.msra.mxu0 %v382
        %860 = vmatprep.subr.mxu0 %v369
        %861 = vmatpush1.msra.mxu0 %v368
        %862 = vmatprep.subr.mxu0 %v355
        %863 = vmatpush1.msra.mxu0 %v354
        %864 = vmatprep.subr.mxu0 %v341
        %865 = vmatpush1.msra.mxu0 %v340
        %866 = vmatprep.subr.mxu0 %v327
        %867 = vmatpush1.msra.mxu0 %v326
        %868 = vmatprep.subr.mxu0 %v313
        %869 = vmatpush1.msra.mxu0 %v312
        %870 = vmatprep.subr.mxu0 %v299
        %871 = vmatpush1.msra.mxu0 %v298
        %872 = vmatprep.subr.mxu0 %v285
        %873 = vmatpush1.msra.mxu0 %v284
        %874 = vmatprep.subr.mxu0 %v271
        %875 = vmatpush1.msra.mxu0 %v270
        %876 = vmatprep.subr.mxu0 %v257
        %877 = vmatpush1.msra.mxu0 %v256
        %878 = vmatprep.subr.mxu0 %v243
        %879 = vmatpush1.msra.mxu0 %v242
        %880 = vmatprep.subr.mxu0 %v229
        %881 = vmatpush1.msra.mxu0 %v228
        %882 = vmatprep.subr.mxu0 %v215
        %883 = vmatpush1.msra.mxu0 %v214
        %884 = vmatprep.subr.mxu0 0.0
        %885 = vmatpush2.msra.mxu0 0.0
        %886 = vmatprep.subr.mxu0 0.0
        %887 = vmatpush2.msra.mxu0 0.0
        %888 = vmatprep.subr.mxu0 0.0
        %889 = vmatpush2.msra.mxu0 0.0
        %890 = vmatprep.subr.mxu0 0.0
        %891 = vmatpush2.msra.mxu0 0.0
        %892 = vmatprep.subr.mxu0 0.0
        %893 = vmatpush2.msra.mxu0 0.0
        %894 = vmatprep.subr.mxu0 0.0
        %895 = vmatpush2.msra.mxu0 0.0
        %896 = vmatprep.subr.mxu0 0.0
        %897 = vmatpush2.msra.mxu0 0.0
        %898 = vmatprep.subr.mxu0 0.0
        %899 = vmatpush2.msra.mxu0 0.0
        %900 = vmatprep.subr.mxu0 0.0
        %901 = vmatpush2.msra.mxu0 0.0
        %902 = vmatprep.subr.mxu0 0.0
        %903 = vmatpush2.msra.mxu0 0.0
        %904 = vmatprep.subr.mxu0 0.0
        %905 = vmatpush2.msra.mxu0 0.0
        %906 = vmatprep.subr.mxu0 0.0
        %907 = vmatpush2.msra.mxu0 0.0
        %908 = vmatprep.subr.mxu0 0.0
        %909 = vmatpush2.msra.mxu0 0.0
        %910 = vmatprep.subr.mxu0 0.0
        %911 = vmatpush2.msra.mxu0 0.0
        %912 = vmatprep.subr.mxu0 0.0
        %913 = vmatpush2.msra.mxu0 0.0
        %914 = vmatprep.subr.mxu0 0.0
        %915 = vmatpush2.msra.mxu0 0.0
        %916 = vmatprep.mubr.f32.mxu0 0.0
        %917 = vmatmul.mubr.f32.gmra.mxu0 %v201
        %v918 = vpop.f32.mrf.mxu0
        %v919 = vadd.f32 0.0, %v918
        %v920 = vpop.f32.mrf.mxu0
        %v921 = vadd.f32 0.0, %v920
        %922 = vdwg.mxu0
        %v923 = vmax.f32 %v493, %v495
        %v924 = vmax.f32 %v923, %v564
        %v925 = vmax.f32 %v924, %v566
        %v926 = vmax.f32 %v925, %v635
        %v927 = vmax.f32 %v926, %v637
        %v928 = vmax.f32 %v927, %v706
        %v929 = vmax.f32 %v928, %v708
        %v930 = vmax.f32 %v929, %v777
        %v931 = vmax.f32 %v930, %v779
        %v932 = vmax.f32 %v931, %v848
        %v933 = vmax.f32 %v932, %v850
        %v934 = vmax.f32 %v933, %v919
        %v935 = vmax.f32 %v934, %v921
        %v936 = vld [vmem:[%s2] sm:$0x1]
        %v938 = vlaneseq
        %v939 = vshrl.u32 %v938, 7
        %v940 = vsub.s32 0, %v939
        %v941 = vrot.slane %v936, %v940
        %v943 = vadd.f32 %v935, %v941
        %944 = vst [vmem:[%s200] sm:$0xff] %v943
        %s945 = sand.u32 %s97, 1
        %s946 = scalar_lea.sflag [#allocation4], %s945
        %s947 = sand.u32 %s97, 1
        %s948 = smul.addr %s947, 8
        %s949 = scalar_lea.vmem [#allocation7], %s948
        // Predicated region
        $region41: #{tpu_custom_call.1} parent=31 // pred_check
          %p950 = pneg %p107
        $region42: #{tpu_custom_call.1} parent=31 // pred_check_branch
          %952 = sbr.rel (%p950) target = $region44
        $region43: #{tpu_custom_call.1} parent=31 // pred_region
          %s954 = ssub.s32 128, 128
          %955 = vsyncadd %s946, %s954
          %s956 = smul.addr %s21, 128
          %s957 = scalar_lea.hbm %s3, %s956
          %s959 = sshll.u32 %s949, 4
          %s960 = int_to_ptr.vmem [resolvable:$true] %s959
          %962 = dma.vmem_to_hbm [thread:$0]  %s960, 128, %s957, %s946
        $region44: #{tpu_custom_call.1} parent=31 // pred_fallthru
          _
      $region32: #{tpu_custom_call.1} parent=5 // pred_fallthru
        _
      %p963 = scmp.le.s32.totalorder 2, %s16
      // Predicated region
      $region45: #{tpu_custom_call.1} parent=5 // pred_check
        %p964 = pneg %p963
      $region46: #{tpu_custom_call.1} parent=5 // pred_check_branch
        %966 = sbr.rel (%p964) target = $region48
      $region47: #{tpu_custom_call.1} parent=5 // pred_region
        %s967 = ssub.s32 %s16, 2
        // Predicated region
        $region49: #{tpu_custom_call.1} parent=47 // pred_check
          %p968 = pneg %p113
        $region50: #{tpu_custom_call.1} parent=47 // pred_check_branch
          %970 = sbr.rel (%p968) target = $region52
        $region51: #{tpu_custom_call.1} parent=47 // pred_region
          %s971 = sand.u32 %s98, 1
          %s972 = scalar_lea.sflag [#allocation4], %s971
          %s973 = sand.u32 %s98, 1
          %s974 = smul.addr %s973, 8
          %s975 = scalar_lea.vmem [#allocation7], %s974
          %976 = dma.done %s972, 128
        $region52: #{tpu_custom_call.1} parent=47 // pred_fallthru
          _
      $region48: #{tpu_custom_call.1} parent=5 // pred_fallthru
        _
    $region6: #{tpu_custom_call.1} parent=1 // loop_footer
      %s20 = sadd.s32 1, %s16
    $region7: #{tpu_custom_call.1} parent=1 // loop_footer_branch
      %15 = sbr.rel target = $region3
    $region8: #{tpu_custom_call.1} parent=1 // loop_exit
      _
    %977 = vsyncpa [#allocation3], 1
    %s978 = scalar_lea.sflag [#allocation3], 1
    %979 = vsyncpa %s978, 1
    %980 = vsyncpa [#allocation6], 1
    %981 = vsyncpa [#allocation4], 1
    %s982 = scalar_lea.sflag [#allocation4], 1
    %983 = vsyncpa %s982, 1

</llo_original>
